<compile_context>
chip_gen: v7x
topology: tpu7x:2x2x1
jax: 0.10.0
libtpu: 0.0.40
codegen_flags: <defaults>
</compile_context>

<pallas_src>
import functools

import jax
import jax.numpy as jnp
from jax.experimental import pallas as pl
from jax.experimental.pallas import tpu as pltpu


def _pick_groups_per_tile(batch, n_tokens, target_rows):
    """Pick (s, b)-groups per row tile.

    g must divide B (tiles never straddle a token group) and satisfy the TPU
    sublane constraint on the (g, 6) output block: g == B or g % 8 == 0.
    """
    candidates = [g for g in range(1, batch + 1)
                  if batch % g == 0 and (g == batch or g % 8 == 0)]
    best = max(candidates)                       # fallback: whole batch per tile
    under = [g for g in candidates if g * n_tokens <= target_rows]
    if under:
        best = max(under)
    return best


def _head_stabilizer_kernel(theta_lr, n_tokens,
                            complete_ref, cropped_ref,
                            w1a_ref, w1b_ref, w2_ref,
                            o_ref, hc_ref):
    """Grid point (r, s): row tile r of (source, target) pair s.

    complete_ref : (tm, E) bf16  ViT features of the full source images (row tile)
    cropped_ref  : (tm, E) bf16  CrossViT features of pair s (same row tile)
    w1a_ref      : (E, E)  bf16  rows [:E]  of head.Linear(2E->E).weight.T
    w1b_ref      : (E, E)  bf16  rows [E:]  of head.Linear(2E->E).weight.T
    w2_ref       : (E, 6)  bf16  head.Linear(E->6).weight.T
    o_ref        : (g, 6)  f32   stabilized theta for the g batch groups of this tile
    hc_ref       : (tm, E) f32   scratch: complete-tile @ W1a, computed once per r
    """
    s = pl.program_id(1)

    # The `complete` half of the concat does not depend on the pair index s:
    # compute it once per row tile and keep it VMEM-resident for s = 1..S-1.
    @pl.when(s == 0)
    def _():
        hc_ref[...] = jnp.dot(complete_ref[...], w1a_ref[...],
                              preferred_element_type=jnp.float32)

    # head[0..1]: Linear(2E->E, bias=False) + ReLU (concat folded into two dots).
    h = jnp.maximum(
        hc_ref[...] + jnp.dot(cropped_ref[...], w1b_ref[...],
                              preferred_element_type=jnp.float32),
        0.0)                                                        # (tm, E) f32

    # head[2..3]: Linear(E->6, bias=False) + Tanh.  bf16 MXU operands, f32
    # accumulation; tanh stays f32 (no bf16 EUP on v5e).
    t = jnp.tanh(jnp.dot(h.astype(w2_ref.dtype), w2_ref[...],
                         preferred_element_type=jnp.float32))       # (tm, 6) f32

    # .mean(dim=1): per-(s, b) token mean via reshape + sum (tm is a multiple
    # of n_tokens, so groups are tile-aligned).  No dense pooling matmul.
    g = o_ref.shape[0]
    theta = jnp.sum(t.reshape(g, n_tokens, 6), axis=1) * jnp.float32(1.0 / n_tokens)

    # TnfStabilizer (affine): theta_lr * theta + identity; passthrough if lr==1.
    if theta_lr == 1:                     # static (trace-time) comparison
        o_ref[...] = theta
    else:
        lane = jax.lax.broadcasted_iota(jnp.int32, (g, 6), 1)
        identity = jnp.where((lane == 0) | (lane == 4),
                             jnp.float32(1.0), jnp.float32(0.0))
        o_ref[...] = jnp.float32(theta_lr) * theta + identity


def regvit_head_forward(complete_out, cropped_out_stack, head_w1, head_w2,
                        theta_lr=0.1, target_tile_rows=2048):
    """complete_out: (B, N, E);  cropped_out_stack: (S, B, N, E);
    head_w1: (E, 2E) (= nn.Linear(2E, E).weight);  head_w2: (6, E).
    Returns a list of S arrays of shape (B, 6), like regViTNet.forward."""
    B, N, E = complete_out.shape
    S = cropped_out_stack.shape[0]

    # bf16 operands for the MXU; f32 accumulation happens inside the kernel.
    w1t = jnp.transpose(head_w1).astype(jnp.bfloat16)        # (2E, E)
    w1a, w1b = w1t[:E], w1t[E:]                              # split the concat
    w2t = jnp.transpose(head_w2).astype(jnp.bfloat16)        # (E, 6)

    complete_flat = complete_out.reshape(B * N, E).astype(jnp.bfloat16)
    cropped_flat = cropped_out_stack.reshape(S, B * N, E).astype(jnp.bfloat16)

    g = _pick_groups_per_tile(B, N, target_tile_rows)        # batch groups per tile
    tm = g * N                                               # rows per tile (mult. of N)
    num_row_tiles = (B * N) // tm

    kernel = functools.partial(_head_stabilizer_kernel, theta_lr, N)
    grid_spec = pltpu.PrefetchScalarGridSpec(
        num_scalar_prefetch=0,
        grid=(num_row_tiles, S),          # r outer ("parallel"), s inner ("arbitrary")
        in_specs=[
            # complete features: same block for all s -> fetched once per r
            pl.BlockSpec((tm, E), lambda r, s: (r, 0)),
            # cropped features of pair s, row tile r
            pl.BlockSpec((pl.Squeezed(), tm, E), lambda r, s: (s, r, 0)),
            # weights: constant index_maps -> DMA'd once, VMEM-resident
            pl.BlockSpec((E, E), lambda r, s: (0, 0)),
            pl.BlockSpec((E, E), lambda r, s: (0, 0)),
            pl.BlockSpec((E, 6), lambda r, s: (0, 0)),
        ],
        out_specs=pl.BlockSpec((pl.Squeezed(), g, 6), lambda r, s: (s, r, 0)),
        scratch_shapes=[pltpu.VMEM((tm, E), jnp.float32)],   # hc = complete @ W1a
    )
    theta = pl.pallas_call(
        kernel,
        out_shape=jax.ShapeDtypeStruct((S, B, 6), jnp.float32),
        grid_spec=grid_spec,
        compiler_params=pltpu.CompilerParams(
            dimension_semantics=("parallel", "arbitrary")),
    )(complete_flat, cropped_flat, w1a, w1b, w2t)

    return [theta[s] for s in range(S)]


def _reference(complete_out, cropped_out_stack, head_w1, head_w2, theta_lr=0.1):
    """Pure-JAX f32 reference of head + mean + TnfStabilizer (PyTorch semantics)."""
    ident = jnp.array([1.0, 0.0, 0.0, 0.0, 1.0, 0.0], jnp.float32)
    outs = []
    for s in range(cropped_out_stack.shape[0]):
        x = jnp.concatenate([complete_out, cropped_out_stack[s]], axis=-1)  # (B, N, 2E)
        h = jnp.maximum(x @ head_w1.T, 0.0)
        t = jnp.tanh(h @ head_w2.T)                                         # (B, N, 6)
        theta = t.mean(axis=1)                                              # (B, 6)
        if theta_lr != 1:
            theta = theta_lr * theta + ident
        outs.append(theta)
    return outs


if __name__ == "__main__":
    B, N, E, S = 2, 8, 32, 2      # batch, tokens, embed_dim, num source images
    key = jax.random.PRNGKey(0)
    k1, k2, k3, k4 = jax.random.split(key, 4)

    # Deterministic synthetic transformer outputs and head parameters.
    complete_out = jax.random.normal(k1, (B, N, E), jnp.float32)
    cropped_out_stack = jax.random.normal(k2, (S, B, N, E), jnp.float32)
    head_w1 = jax.random.normal(k3, (E, 2 * E), jnp.float32) / jnp.sqrt(2.0 * E)
    head_w2 = jax.random.normal(k4, (6, E), jnp.float32) / jnp.sqrt(float(E))

    theta_list = regvit_head_forward(complete_out, cropped_out_stack,
                                     head_w1, head_w2, theta_lr=0.1)
    theta_list = [jax.block_until_ready(t) for t in theta_list]

    ref_list = _reference(complete_out, cropped_out_stack,
                          head_w1, head_w2, theta_lr=0.1)
    for got, want in zip(theta_list, ref_list):
        assert got.shape == (B, 6), got.shape
        # bf16 MXU operands (f32 accumulation) vs. the pure-f32 reference.
        assert jnp.allclose(got, want, atol=1e-2, rtol=1e-2), (got, want)

    print("KERNEL_OK")
</pallas_src>

<mosaic_0001>
module attributes {stable_mosaic.version = 11 : i64} {
  func.func @_head_stabilizer_kernel(%arg0: i32, %arg1: i32, %arg2: memref<16x32xbf16, #tpu.memory_space<vmem>>, %arg3: memref<1x16x32xbf16, #tpu.memory_space<vmem>>, %arg4: memref<32x32xbf16, #tpu.memory_space<vmem>>, %arg5: memref<32x32xbf16, #tpu.memory_space<vmem>>, %arg6: memref<32x6xbf16, #tpu.memory_space<vmem>>, %arg7: memref<1x2x6xf32, #tpu.memory_space<vmem>>, %arg8: memref<16x32xf32, #tpu.memory_space<vmem>>) attributes {dimension_semantics = [#tpu.dimension_semantics<parallel>, #tpu.dimension_semantics<arbitrary>], iteration_bounds = array<i64: 1, 2>, scalar_prefetch = 0 : i64, scratch_operands = 1 : i64, tpu.core_type = #tpu.core_type<tc>, window_params = [{transform_indices = @transform_0, window_bounds = array<i64: 16, 32>}, {transform_indices = @transform_1, window_bounds = array<i64: 1, 16, 32>}, {pipeline_mode = #tpu.pipeline_mode<synchronous>, transform_indices = @transform_2, window_bounds = array<i64: 32, 32>}, {pipeline_mode = #tpu.pipeline_mode<synchronous>, transform_indices = @transform_3, window_bounds = array<i64: 32, 32>}, {pipeline_mode = #tpu.pipeline_mode<synchronous>, transform_indices = @transform_4, window_bounds = array<i64: 32, 6>}, {transform_indices = @transform_5, window_bounds = array<i64: 1, 2, 6>}]} {
    %c0_i32 = arith.constant 0 : i32
    %0 = arith.cmpi eq, %arg1, %c0_i32 : i32
    %1 = arith.extui %0 : i1 to i32
    %c0_i32_0 = arith.constant 0 : i32
    %2 = arith.cmpi ne, %1, %c0_i32_0 : i32
    scf.if %2 {
      %c0_20 = arith.constant 0 : index
      %c0_21 = arith.constant 0 : index
      %34 = vector.load %arg2[%c0_20, %c0_21] : memref<16x32xbf16, #tpu.memory_space<vmem>>, vector<16x32xbf16>
      %c0_22 = arith.constant 0 : index
      %c0_23 = arith.constant 0 : index
      %35 = vector.load %arg4[%c0_22, %c0_23] : memref<32x32xbf16, #tpu.memory_space<vmem>>, vector<32x32xbf16>
      %cst_24 = arith.constant dense<0.000000e+00> : vector<16x32xf32>
      %36 = tpu.matmul %34, %35, %cst_24 {dimension_numbers = #tpu.dot_dimension_numbers<[1], [0], [0], [1], [0, 0, 1, 1], [], []>} : vector<16x32xbf16>, vector<32x32xbf16>, vector<16x32xf32> -> vector<16x32xf32>
      %c0_25 = arith.constant 0 : index
      %c0_26 = arith.constant 0 : index
      %37 = vector.load %arg8[%c0_25, %c0_26] : memref<16x32xf32, #tpu.memory_space<vmem>>, vector<16x32xf32>
      tpu.vector_store %arg8[%c0_25, %c0_26], %36 {strides = array<i32>} : memref<16x32xf32, #tpu.memory_space<vmem>>, vector<16x32xf32>,
    } else {
    }
    %c0 = arith.constant 0 : index
    %c0_1 = arith.constant 0 : index
    %3 = vector.load %arg8[%c0, %c0_1] : memref<16x32xf32, #tpu.memory_space<vmem>>, vector<16x32xf32>
    %c0_2 = arith.constant 0 : index
    %c0_3 = arith.constant 0 : index
    %c0_4 = arith.constant 0 : index
    %4 = vector.load %arg3[%c0_2, %c0_3, %c0_4] : memref<1x16x32xbf16, #tpu.memory_space<vmem>>, vector<1x16x32xbf16>
    %5 = vector.shape_cast %4 : vector<1x16x32xbf16> to vector<16x32xbf16>
    %c0_5 = arith.constant 0 : index
    %c0_6 = arith.constant 0 : index
    %6 = vector.load %arg5[%c0_5, %c0_6] : memref<32x32xbf16, #tpu.memory_space<vmem>>, vector<32x32xbf16>
    %cst = arith.constant dense<0.000000e+00> : vector<16x32xf32>
    %7 = tpu.matmul %5, %6, %cst {dimension_numbers = #tpu.dot_dimension_numbers<[1], [0], [0], [1], [0, 0, 1, 1], [], []>} : vector<16x32xbf16>, vector<32x32xbf16>, vector<16x32xf32> -> vector<16x32xf32>
    %8 = arith.addf %3, %7 : vector<16x32xf32>
    %cst_7 = arith.constant 0.000000e+00 : f32
    %9 = vector.broadcast %cst_7 : f32 to vector<16x32xf32>
    %10 = arith.maximumf %8, %9 : vector<16x32xf32>
    %11 = arith.truncf %10 : vector<16x32xf32> to vector<16x32xbf16>
    %c0_8 = arith.constant 0 : index
    %c0_9 = arith.constant 0 : index
    %12 = vector.load %arg6[%c0_8, %c0_9] : memref<32x6xbf16, #tpu.memory_space<vmem>>, vector<32x6xbf16>
    %cst_10 = arith.constant dense<0.000000e+00> : vector<16x6xf32>
    %13 = tpu.matmul %11, %12, %cst_10 {dimension_numbers = #tpu.dot_dimension_numbers<[1], [0], [0], [1], [0, 0, 1, 1], [], []>} : vector<16x32xbf16>, vector<32x6xbf16>, vector<16x6xf32> -> vector<16x6xf32>
    %14 = math.tanh %13 : vector<16x6xf32>
    %15 = vector.shape_cast %14 : vector<16x6xf32> to vector<2x8x6xf32>
    %cst_11 = arith.constant dense<0.000000e+00> : vector<2x6xf32>
    %16 = vector.multi_reduction <add>, %15, %cst_11 [1] : vector<2x8x6xf32> to vector<2x6xf32>
    %cst_12 = arith.constant 1.250000e-01 : f32
    %17 = vector.broadcast %cst_12 : f32 to vector<2x6xf32>
    %18 = arith.mulf %16, %17 : vector<2x6xf32>
    %19 = tpu.iota {dimensions = array<i32: 1>} : vector<2x6xi32>
    %c0_i32_13 = arith.constant 0 : i32
    %20 = vector.broadcast %c0_i32_13 : i32 to vector<2x6xi32>
    %21 = arith.cmpi eq, %19, %20 : vector<2x6xi32>
    %c4_i32 = arith.constant 4 : i32
    %22 = vector.broadcast %c4_i32 : i32 to vector<2x6xi32>
    %23 = arith.cmpi eq, %19, %22 : vector<2x6xi32>
    %24 = arith.ori %21, %23 : vector<2x6xi1>
    %cst_14 = arith.constant 1.000000e+00 : f32
    %cst_15 = arith.constant 0.000000e+00 : f32
    %25 = vector.broadcast %cst_14 : f32 to vector<2x6xf32>
    %26 = vector.broadcast %cst_15 : f32 to vector<2x6xf32>
    %27 = arith.select %24, %25, %26 : vector<2x6xi1>, vector<2x6xf32>
    %cst_16 = arith.constant 1.000000e-01 : f32
    %28 = vector.broadcast %cst_16 : f32 to vector<2x6xf32>
    %29 = arith.mulf %28, %18 : vector<2x6xf32>
    %30 = arith.addf %29, %27 : vector<2x6xf32>
    %c0_17 = arith.constant 0 : index
    %c0_18 = arith.constant 0 : index
    %c0_19 = arith.constant 0 : index
    %31 = vector.load %arg7[%c0_17, %c0_18, %c0_19] : memref<1x2x6xf32, #tpu.memory_space<vmem>>, vector<1x2x6xf32>
    %32 = vector.shape_cast %31 : vector<1x2x6xf32> to vector<2x6xf32>
    %33 = vector.shape_cast %30 : vector<2x6xf32> to vector<1x2x6xf32>
    tpu.vector_store %arg7[%c0_17, %c0_18, %c0_19], %33 {strides = array<i32>} : memref<1x2x6xf32, #tpu.memory_space<vmem>>, vector<1x2x6xf32>,
    return
  }
  func.func @transform_0(%arg0: i32, %arg1: i32) -> (i32, i32) {
    %c0_i32 = arith.constant 0 : i32
    %c0_i32_0 = arith.constant 0 : i32
    return %arg0, %c0_i32 : i32, i32
  }
  func.func @transform_1(%arg0: i32, %arg1: i32) -> (i32, i32, i32) {
    %c0_i32 = arith.constant 0 : i32
    %c0_i32_0 = arith.constant 0 : i32
    return %arg1, %arg0, %c0_i32 : i32, i32, i32
  }
  func.func @transform_2(%arg0: i32, %arg1: i32) -> (i32, i32) {
    %c0_i32 = arith.constant 0 : i32
    %c0_i32_0 = arith.constant 0 : i32
    %c0_i32_1 = arith.constant 0 : i32
    return %c0_i32, %c0_i32_0 : i32, i32
  }
  func.func @transform_3(%arg0: i32, %arg1: i32) -> (i32, i32) {
    %c0_i32 = arith.constant 0 : i32
    %c0_i32_0 = arith.constant 0 : i32
    %c0_i32_1 = arith.constant 0 : i32
    return %c0_i32, %c0_i32_0 : i32, i32
  }
  func.func @transform_4(%arg0: i32, %arg1: i32) -> (i32, i32) {
    %c0_i32 = arith.constant 0 : i32
    %c0_i32_0 = arith.constant 0 : i32
    %c0_i32_1 = arith.constant 0 : i32
    return %c0_i32, %c0_i32_0 : i32, i32
  }
  func.func @transform_5(%arg0: i32, %arg1: i32) -> (i32, i32, i32) {
    %c0_i32 = arith.constant 0 : i32
    %c0_i32_0 = arith.constant 0 : i32
    return %arg1, %arg0, %c0_i32 : i32, i32, i32
  }
}

</mosaic_0001>

<llo_original>
// kernel: tpu_custom_call.1
$region0: #{tpu_custom_call.1}
  #allocation0 [shape = 'u32[]', space=smem, size = 0x4, offset = 0x4, fixed_abs, tag = 'smem constant byte address 0x4 - core index']
  #allocation1 [shape = 'u32[144,128]{1,0:T(1,128)}', space=vmem, size = 0x12000, scoped, tag = 'internal scratch']
  #allocation2 [shape = 'f32[16,32]{1,0:T(8,128)}', space=vmem, size = 0x2000, scoped, tag = 'scratch operand']
  %s0 = inlined_call_operand.hbm [shape: bf16[16,32], index: 0, kind: input, shape index: {}]
  %s1 = inlined_call_operand.vmem [shape: bf16[2,16,32], index: 1, kind: input, shape index: {}]
  %s2 = inlined_call_operand.hbm [shape: bf16[32,32], index: 2, kind: input, shape index: {}]
  %s3 = inlined_call_operand.hbm [shape: bf16[32,32], index: 3, kind: input, shape index: {}]
  %s4 = inlined_call_operand.vmem [shape: bf16[32,6], index: 4, kind: input, shape index: {}]
  %s5 = inlined_call_operand.hbm [shape: f32[2,2,6], index: 5, kind: output, shape index: {}]
  %s6 = sld [smem:[#allocation0]]
  $region69: #{tpu_custom_call.1} parent=0
    _
  %s8 = ssub.s32 1, %s6
  %s9 = scalar_select 0, %s8, %s6
  $region1: #{tpu_custom_call.1} parent=0
    #allocation3 [shape = 'u8[4096]{0}', space=vmem, size = 0x1000, scoped, tag = 'input window, operand 0, single buffered']
    #allocation4 [shape = 's32[2]{0}', space=sflag, size = 0x8, scoped, tag = 'scoped memory for tpu_custom_call.1']
    #allocation5 [shape = 's32[2]{0}', space=sflag, size = 0x8, scoped, tag = 'scoped memory for tpu_custom_call.1']
    #allocation6 [shape = 'u8[8192]{0}', space=vmem, size = 0x2000, scoped, tag = 'input window, operand 2, single buffered']
    #allocation7 [shape = 's32[1]{0}', space=sflag, size = 0x4, scoped, tag = 'scoped memory for tpu_custom_call.1']
    #allocation8 [shape = 'u8[8192]{0}', space=vmem, size = 0x2000, scoped, tag = 'input window, operand 3, single buffered']
    #allocation9 [shape = 'u8[2048]{0}', space=vmem, size = 0x800, scoped, tag = 'output window, operand 0']
    %10 = vsyncpa [#allocation4], 0
    %11 = vsyncpa [#allocation7], 0
    %12 = vsyncpa [#allocation5], 0
    %s13 = scalar_lea.sflag [#allocation5], 1
    %14 = vsyncpa %s13, 0
    loop: start=0, step=1, limit=4
    $region2: #{tpu_custom_call.1} parent=1 // loop_pre_header
      _
    $region3: #{tpu_custom_call.1} parent=1 // loop_header
      %s16 = sphi 0, %s20
      %p17 = scmp.ge.s32.totalorder %s16, 4
      %s23 = sphi 0, %s35
      %s24 = sphi 0, %s31
      %s25 = sphi 0, %s23
      %s26 = sphi 0, %s24
      %s27 = sphi 0, %s25
      %s28 = sphi 0, %s26
      %s38 = sphi 0, %s40
      %s41 = sphi 0, %s38
      %s42 = sphi 0, %s41
      %s58 = sphi 0, %s42
      %s66 = sphi 0, %s68
      %s69 = sphi 0, %s66
      %s70 = sphi 0, %s69
      %s86 = sphi 0, %s70
      %s90 = sphi 0, %s90
      %s92 = sphi 0, %s90
      %s93 = sphi 0, %s92
      %s107 = sphi 0, %s93
      %s111 = sphi 0, %s111
      %s113 = sphi 0, %s111
      %s114 = sphi 0, %s113
      %s128 = sphi 0, %s114
      %s132 = sphi 0, %s132
      %s134 = sphi 0, %s132
      %s135 = sphi 0, %s134
      %s149 = sphi 0, %s135
      %s157 = sphi 0, %s159
      %s160 = sphi 0, %s157
      %s161 = sphi 0, %s160
      %s177 = sphi 0, %s161
    $region4: #{tpu_custom_call.1} parent=1 // loop_header_branch
      %19 = sbr.rel (%p17) target = $region8
    $region5: #{tpu_custom_call.1} parent=1 // loop_body
      %s21 = ssub.s32 %s16, 1
      %s22 = ssub.s32 %s16, 2
      %s29 = sadd.s32 1, %s24
      %p30 = scmp.ge.s32.totalorder %s29, 2
      %s31 = scalar_select %p30, 0, %s29
      %s32 = sadd.s32 1, %s23
      %s33 = scalar_select %p30, %s32, %s23
      %p34 = scmp.ge.s32.totalorder %s33, 1
      %s35 = scalar_select %p34, 0, %s33
      %s36 = ssub.s32 %s23, %s35
      %p37 = scmp.eq.s32.totalorder %s36, 0
      %s39 = sadd.s32 %s38, 1
      %s40 = scalar_select %p37, %s38, %s39
      %p43 = pneg %p37
      %p44 = scmp.eq.s32.totalorder %s16, 1
      %p45 = por %p43, %p44
      %p46 = scmp.ne.s32.totalorder %s38, %s41
      %p47 = scmp.eq.s32.totalorder %s16, 0
      %p48 = por %p46, %p47
      %p49 = scmp.ne.s32.totalorder %s38, %s41
      %p50 = scmp.eq.s32.totalorder %s21, 1
      %p51 = por %p49, %p50
      %p52 = scmp.ne.s32.totalorder %s41, %s42
      %p53 = scmp.eq.s32.totalorder %s21, 0
      %p54 = por %p52, %p53
      %p55 = scmp.ne.s32.totalorder %s41, %s42
      %p56 = scmp.eq.s32.totalorder %s22, 1
      %p57 = por %p55, %p56
      %p59 = scmp.ne.s32.totalorder %s42, %s58
      %p60 = scmp.eq.s32.totalorder %s22, 0
      %p61 = por %p59, %p60
      %s62 = ssub.s32 %s24, %s31
      %s63 = ssub.s32 %s23, %s35
      %s64 = sor.u32 %s62, %s63
      %p65 = scmp.eq.s32.totalorder %s64, 0
      %s67 = sadd.s32 %s66, 1
      %s68 = scalar_select %p65, %s66, %s67
      %p71 = pneg %p65
      %p72 = scmp.eq.s32.totalorder %s16, 1
      %p73 = por %p71, %p72
      %p74 = scmp.ne.s32.totalorder %s66, %s69
      %p75 = scmp.eq.s32.totalorder %s16, 0
      %p76 = por %p74, %p75
      %p77 = scmp.ne.s32.totalorder %s66, %s69
      %p78 = scmp.eq.s32.totalorder %s21, 1
      %p79 = por %p77, %p78
      %p80 = scmp.ne.s32.totalorder %s69, %s70
      %p81 = scmp.eq.s32.totalorder %s21, 0
      %p82 = por %p80, %p81
      %p83 = scmp.ne.s32.totalorder %s69, %s70
      %p84 = scmp.eq.s32.totalorder %s22, 1
      %p85 = por %p83, %p84
      %p87 = scmp.ne.s32.totalorder %s70, %s86
      %p88 = scmp.eq.s32.totalorder %s22, 0
      %p89 = por %p87, %p88
      %s91 = sadd.s32 %s90, 1
      %p94 = scmp.eq.s32.totalorder %s16, 1
      %p95 = scmp.ne.s32.totalorder %s90, %s92
      %p96 = scmp.eq.s32.totalorder %s16, 0
      %p97 = por %p95, %p96
      %p98 = scmp.ne.s32.totalorder %s90, %s92
      %p99 = scmp.eq.s32.totalorder %s21, 1
      %p100 = por %p98, %p99
      %p101 = scmp.ne.s32.totalorder %s92, %s93
      %p102 = scmp.eq.s32.totalorder %s21, 0
      %p103 = por %p101, %p102
      %p104 = scmp.ne.s32.totalorder %s92, %s93
      %p105 = scmp.eq.s32.totalorder %s22, 1
      %p106 = por %p104, %p105
      %p108 = scmp.ne.s32.totalorder %s93, %s107
      %p109 = scmp.eq.s32.totalorder %s22, 0
      %p110 = por %p108, %p109
      %s112 = sadd.s32 %s111, 1
      %p115 = scmp.eq.s32.totalorder %s16, 1
      %p116 = scmp.ne.s32.totalorder %s111, %s113
      %p117 = scmp.eq.s32.totalorder %s16, 0
      %p118 = por %p116, %p117
      %p119 = scmp.ne.s32.totalorder %s111, %s113
      %p120 = scmp.eq.s32.totalorder %s21, 1
      %p121 = por %p119, %p120
      %p122 = scmp.ne.s32.totalorder %s113, %s114
      %p123 = scmp.eq.s32.totalorder %s21, 0
      %p124 = por %p122, %p123
      %p125 = scmp.ne.s32.totalorder %s113, %s114
      %p126 = scmp.eq.s32.totalorder %s22, 1
      %p127 = por %p125, %p126
      %p129 = scmp.ne.s32.totalorder %s114, %s128
      %p130 = scmp.eq.s32.totalorder %s22, 0
      %p131 = por %p129, %p130
      %s133 = sadd.s32 %s132, 1
      %p136 = scmp.eq.s32.totalorder %s16, 1
      %p137 = scmp.ne.s32.totalorder %s132, %s134
      %p138 = scmp.eq.s32.totalorder %s16, 0
      %p139 = por %p137, %p138
      %p140 = scmp.ne.s32.totalorder %s132, %s134
      %p141 = scmp.eq.s32.totalorder %s21, 1
      %p142 = por %p140, %p141
      %p143 = scmp.ne.s32.totalorder %s134, %s135
      %p144 = scmp.eq.s32.totalorder %s21, 0
      %p145 = por %p143, %p144
      %p146 = scmp.ne.s32.totalorder %s134, %s135
      %p147 = scmp.eq.s32.totalorder %s22, 1
      %p148 = por %p146, %p147
      %p150 = scmp.ne.s32.totalorder %s135, %s149
      %p151 = scmp.eq.s32.totalorder %s22, 0
      %p152 = por %p150, %p151
      %s153 = ssub.s32 %s24, %s31
      %s154 = ssub.s32 %s23, %s35
      %s155 = sor.u32 %s153, %s154
      %p156 = scmp.eq.s32.totalorder %s155, 0
      %s158 = sadd.s32 %s157, 1
      %s159 = scalar_select %p156, %s157, %s158
      %p162 = pneg %p156
      %p163 = scmp.eq.s32.totalorder %s16, 1
      %p164 = por %p162, %p163
      %p165 = scmp.ne.s32.totalorder %s157, %s160
      %p166 = scmp.eq.s32.totalorder %s16, 0
      %p167 = por %p165, %p166
      %p168 = scmp.ne.s32.totalorder %s157, %s160
      %p169 = scmp.eq.s32.totalorder %s21, 1
      %p170 = por %p168, %p169
      %p171 = scmp.ne.s32.totalorder %s160, %s161
      %p172 = scmp.eq.s32.totalorder %s21, 0
      %p173 = por %p171, %p172
      %p174 = scmp.ne.s32.totalorder %s160, %s161
      %p175 = scmp.eq.s32.totalorder %s22, 1
      %p176 = por %p174, %p175
      %p178 = scmp.ne.s32.totalorder %s161, %s177
      %p179 = scmp.eq.s32.totalorder %s22, 0
      %p180 = por %p178, %p179
      %p181 = scmp.le.s32.totalorder 1, %s16
      %p182 = scmp.lt.s32.totalorder %s16, 3
      %p183 = pnand %p181, %p182
      %p184 = pneg %p183
      // Predicated region
      $region9: #{tpu_custom_call.1} parent=5 // pred_check
        _
      $region10: #{tpu_custom_call.1} parent=5 // pred_check_branch
        %186 = sbr.rel (%p183) target = $region12
      $region11: #{tpu_custom_call.1} parent=5 // pred_region
        %s187 = ssub.s32 %s16, 1
        // Predicated region
        $region13: #{tpu_custom_call.1} parent=11 // pred_check
          %p188 = pneg %p54
        $region14: #{tpu_custom_call.1} parent=11 // pred_check_branch
          %190 = sbr.rel (%p188) target = $region16
        $region15: #{tpu_custom_call.1} parent=11 // pred_region
          %s191 = smul.u32 2, %s25
          %s193 = ssub.s32 128, 128
          %194 = vsyncadd [#allocation4], %s193
          %s195 = smul.addr %s191, 64
          %s196 = scalar_lea.hbm %s0, %s195
          %s197 = sshll.u32 [#allocation3], 4
          %s198 = int_to_ptr.vmem [resolvable:$true] %s197
          %203 = dma.hbm_to_vmem [thread:$0]  %s196, 128, %s198, [#allocation4], 64, 64, 4
        $region16: #{tpu_custom_call.1} parent=11 // pred_fallthru
          _
        // Predicated region
        $region17: #{tpu_custom_call.1} parent=11 // pred_check
          %p204 = pneg %p103
        $region18: #{tpu_custom_call.1} parent=11 // pred_check_branch
          %206 = sbr.rel (%p204) target = $region20
        $region19: #{tpu_custom_call.1} parent=11 // pred_region
          %s208 = ssub.s32 256, 256
          %209 = vsyncadd [#allocation7], %s208
          %s210 = sshll.u32 [#allocation6], 4
          %s211 = int_to_ptr.vmem [resolvable:$true] %s210
          %216 = dma.hbm_to_vmem [thread:$0]  %s2, 256, %s211, [#allocation7], 64, 64, 4
        $region20: #{tpu_custom_call.1} parent=11 // pred_fallthru
          _
        // Predicated region
        $region21: #{tpu_custom_call.1} parent=11 // pred_check
          %p217 = pneg %p124
        $region22: #{tpu_custom_call.1} parent=11 // pred_check_branch
          %219 = sbr.rel (%p217) target = $region24
        $region23: #{tpu_custom_call.1} parent=11 // pred_region
          %s221 = ssub.s32 256, 256
          %222 = vsyncadd [#allocation7], %s221
          %s223 = sshll.u32 [#allocation8], 4
          %s224 = int_to_ptr.vmem [resolvable:$true] %s223
          %229 = dma.hbm_to_vmem [thread:$0]  %s3, 256, %s224, [#allocation7], 64, 64, 4
        $region24: #{tpu_custom_call.1} parent=11 // pred_fallthru
          _
        // Predicated region
        $region25: #{tpu_custom_call.1} parent=11 // pred_check
          %p230 = pneg %p145
        $region26: #{tpu_custom_call.1} parent=11 // pred_check_branch
          %232 = sbr.rel (%p230) target = $region28
        $region27: #{tpu_custom_call.1} parent=11 // pred_region
          _
        $region28: #{tpu_custom_call.1} parent=11 // pred_fallthru
          _
      $region12: #{tpu_custom_call.1} parent=5 // pred_fallthru
        _
      %p233 = scmp.lt.s32.totalorder %s16, 2
      // Predicated region
      $region29: #{tpu_custom_call.1} parent=5 // pred_check
        %p234 = pneg %p233
      $region30: #{tpu_custom_call.1} parent=5 // pred_check_branch
        %236 = sbr.rel (%p234) target = $region32
      $region31: #{tpu_custom_call.1} parent=5 // pred_region
        // Predicated region
        $region33: #{tpu_custom_call.1} parent=31 // pred_check
          %p237 = pneg %p76
        $region34: #{tpu_custom_call.1} parent=31 // pred_check_branch
          %239 = sbr.rel (%p237) target = $region36
        $region35: #{tpu_custom_call.1} parent=31 // pred_region
          %s240 = smul.u32 2, %s23
          %p241 = scmp.lt.s32.totalorder %s24, 1
          %s242 = scalar_select %p241, %s24, 1
          %p243 = scmp.lt.s32.totalorder %s240, 1
          %s244 = scalar_select %p243, %s240, 1
          %s245 = smul.addr %s242, 2
          %s246 = sadd.s32 %s244, %s245
          %s247 = smul.addr %s246, 4
          %s248 = scalar_lea.vmem %s1, %s247
          %s249 = smul.u32 2, %s23
        $region36: #{tpu_custom_call.1} parent=31 // pred_fallthru
          _
      $region32: #{tpu_custom_call.1} parent=5 // pred_fallthru
        _
      %p250 = scmp.le.s32.totalorder 1, %s16
      %p251 = scmp.lt.s32.totalorder %s16, 3
      %p252 = pnand %p250, %p251
      %p253 = pneg %p252
      // Predicated region
      $region37: #{tpu_custom_call.1} parent=5 // pred_check
        _
      $region38: #{tpu_custom_call.1} parent=5 // pred_check_branch
        %255 = sbr.rel (%p252) target = $region40
      $region39: #{tpu_custom_call.1} parent=5 // pred_region
        %s256 = ssub.s32 %s16, 1
        // Predicated region
        $region41: #{tpu_custom_call.1} parent=39 // pred_check
          %p257 = pneg %p54
        $region42: #{tpu_custom_call.1} parent=39 // pred_check_branch
          %259 = sbr.rel (%p257) target = $region44
        $region43: #{tpu_custom_call.1} parent=39 // pred_region
          %260 = dma.done [#allocation4], 128
        $region44: #{tpu_custom_call.1} parent=39 // pred_fallthru
          _
        // Predicated region
        $region45: #{tpu_custom_call.1} parent=39 // pred_check
          %p261 = pneg %p103
        $region46: #{tpu_custom_call.1} parent=39 // pred_check_branch
          %263 = sbr.rel (%p261) target = $region48
        $region47: #{tpu_custom_call.1} parent=39 // pred_region
          %264 = dma.done [#allocation7], 256
        $region48: #{tpu_custom_call.1} parent=39 // pred_fallthru
          _
        // Predicated region
        $region49: #{tpu_custom_call.1} parent=39 // pred_check
          %p265 = pneg %p124
        $region50: #{tpu_custom_call.1} parent=39 // pred_check_branch
          %267 = sbr.rel (%p265) target = $region52
        $region51: #{tpu_custom_call.1} parent=39 // pred_region
          %268 = dma.done [#allocation7], 256
        $region52: #{tpu_custom_call.1} parent=39 // pred_fallthru
          _
        %p269 = pneg %p54
        %p270 = pneg %p51
        %s271 = smul.u32 2, %s25
        %p272 = scmp.lt.s32.totalorder %s26, 1
        %s273 = scalar_select %p272, %s26, 1
        %p274 = scmp.lt.s32.totalorder %s271, 1
        %s275 = scalar_select %p274, %s271, 1
        %s276 = smul.addr %s273, 2
        %s277 = sadd.s32 %s275, %s276
        %s278 = smul.addr %s277, 4
        %s279 = scalar_lea.vmem %s1, %s278
        %p280 = pneg %p82
        %p281 = pneg %p79
        %p282 = pneg %p103
        %p283 = pneg %p100
        %p284 = pneg %p124
        %p285 = pneg %p121
        %p286 = pneg %p145
        %p287 = pneg %p142
        %p288 = pneg %p173
        %p289 = pneg %p170
        %s290 = sand.u32 %s160, 1
        %s291 = scalar_lea.sflag [#allocation5], %s290
        %s292 = sand.u32 %s160, 1
        %s293 = smul.addr %s292, 2
        %s294 = scalar_lea.vmem [#allocation9], %s293
        %s295 = smul.u32 2, %s25
        %s296 = smul.u32 2, %s25
        %p297 = scmp.lt.s32.totalorder %s26, 1
        %s298 = scalar_select %p297, %s26, 1
        %p299 = scmp.lt.s32.totalorder %s296, 1
        %s300 = scalar_select %p299, %s296, 1
        %s301 = smul.addr %s298, 2
        %s302 = sadd.s32 %s300, %s301
        %s303 = smul.addr %s302, 4
        %s304 = scalar_lea.vmem %s1, %s303
        %s305 = smul.u32 2, %s25
        %p307 = scmp.eq.s32.totalorder %s26, 0
        // Predicated region
        $region53: #{tpu_custom_call.1} parent=39 // pred_check
          %p308 = pneg %p307
        $region54: #{tpu_custom_call.1} parent=39 // pred_check_branch
          %310 = sbr.rel (%p308) target = $region56
        $region55: #{tpu_custom_call.1} parent=39 // pred_region
          %v311 = vld [vmem:[#allocation3] sm:$0xf]
          %v312 = vld [vmem:[#allocation3 + $0x4] sm:$0xf]
          %v313 = vld [vmem:[#allocation6] sm:$0xf]
          %v314 = vld [vmem:[#allocation6 + $0x4] sm:$0xf]
          %v315 = vld [vmem:[#allocation6 + $0x8] sm:$0xf]
          %v316 = vld [vmem:[#allocation6 + $0xc] sm:$0xf]
          %v319 = vunpack.c.l.b16 %v311
          %v320 = vunpack.c.l.b16 %v312
          %v321 = vpack.c.b16 %v320, %v319
          %v326 = vunpack.c.l.b16 %v313
          %v327 = vunpack.c.l.b16 %v314
          %v328 = vunpack.c.l.b16 %v315
          %v329 = vunpack.c.l.b16 %v316
          %v330 = vpack.c.b16 %v327, %v326
          %v331 = vpack.c.b16 %v329, %v328
          %vm334 = vcmask 261120
          %v336 = vsel %vm334, %v321, 0
          %338 = vmatprep.subr.bf16.mxu0 0
          %339 = vmatpush1.bf16.msra.mxu0 %v330
          %340 = vmatprep.subr.bf16.mxu0 0
          %341 = vmatpush1.bf16.msra.mxu0 %v331
          %342 = vmatprep.subr.bf16.mxu0 0
          %343 = vmatpush1.bf16.msra.mxu0 0
          %344 = vmatprep.subr.bf16.mxu0 0
          %345 = vmatpush1.bf16.msra.mxu0 0
          %346 = vmatprep.subr.bf16.mxu0 0
          %347 = vmatpush1.bf16.msra.mxu0 0
          %348 = vmatprep.subr.bf16.mxu0 0
          %349 = vmatpush1.bf16.msra.mxu0 0
          %350 = vmatprep.subr.bf16.mxu0 0
          %351 = vmatpush1.bf16.msra.mxu0 0
          %352 = vmatprep.subr.bf16.mxu0 0
          %353 = vmatpush1.bf16.msra.mxu0 0
          %354 = vmatprep.subr.bf16.mxu0 0
          %355 = vmatpush1.bf16.msra.mxu0 0
          %356 = vmatprep.subr.bf16.mxu0 0
          %357 = vmatpush1.bf16.msra.mxu0 0
          %358 = vmatprep.subr.bf16.mxu0 0
          %359 = vmatpush1.bf16.msra.mxu0 0
          %360 = vmatprep.subr.bf16.mxu0 0
          %361 = vmatpush1.bf16.msra.mxu0 0
          %362 = vmatprep.subr.bf16.mxu0 0
          %363 = vmatpush1.bf16.msra.mxu0 0
          %364 = vmatprep.subr.bf16.mxu0 0
          %365 = vmatpush1.bf16.msra.mxu0 0
          %366 = vmatprep.subr.bf16.mxu0 0
          %367 = vmatpush1.bf16.msra.mxu0 0
          %368 = vmatprep.subr.bf16.mxu0 0
          %369 = vmatpush1.bf16.msra.mxu0 0
          %370 = vmatprep.mubr.bf16.mxu0 0
          %371 = vmatmul.mubr.bf16.gmra.mrb[0].mxu0 %v336
          %v372 = vpop.f32.mrb[0].mxu0
          %v373 = vadd.f32 0.0, %v372
          %v374 = vpop.f32.mrb[0].mxu0
          %v375 = vpop.f32.mrb[0].mxu0
          %v376 = vadd.f32 0.0, %v375
          %v377 = vpop.f32.mrb[0].mxu0
          %378 = vdwg.mxu0
          %379 = vst.msk [vmem:[#allocation2] sm:$0xff] %vm334, %v373
          %380 = vst.msk [vmem:[#allocation2 + $0x8] sm:$0xff] %vm334, %v376
        $region56: #{tpu_custom_call.1} parent=39 // pred_fallthru
          _
        %v381 = vld [vmem:[#allocation2] sm:$0xff]
        %v382 = vld [vmem:[#allocation2 + $0x8] sm:$0xff]
        %v383 = vld [vmem:[%s304] sm:$0xf]
        %v384 = vld [vmem:[%s304 + $0x4] sm:$0xf]
        %v385 = vld [vmem:[#allocation8] sm:$0xf]
        %v386 = vld [vmem:[#allocation8 + $0x4] sm:$0xf]
        %v387 = vld [vmem:[#allocation8 + $0x8] sm:$0xf]
        %v388 = vld [vmem:[#allocation8 + $0xc] sm:$0xf]
        %v391 = vunpack.c.l.b16 %v383
        %v392 = vunpack.c.l.b16 %v384
        %v393 = vpack.c.b16 %v392, %v391
        %v398 = vunpack.c.l.b16 %v385
        %v399 = vunpack.c.l.b16 %v386
        %v400 = vunpack.c.l.b16 %v387
        %v401 = vunpack.c.l.b16 %v388
        %v402 = vpack.c.b16 %v399, %v398
        %v403 = vpack.c.b16 %v401, %v400
        %vm406 = vcmask 261120
        %v408 = vsel %vm406, %v393, 0
        %410 = vmatprep.subr.bf16.mxu0 0
        %411 = vmatpush1.bf16.msra.mxu0 %v402
        %412 = vmatprep.subr.bf16.mxu0 0
        %413 = vmatpush1.bf16.msra.mxu0 %v403
        %414 = vmatprep.subr.bf16.mxu0 0
        %415 = vmatpush1.bf16.msra.mxu0 0
        %416 = vmatprep.subr.bf16.mxu0 0
        %417 = vmatpush1.bf16.msra.mxu0 0
        %418 = vmatprep.subr.bf16.mxu0 0
        %419 = vmatpush1.bf16.msra.mxu0 0
        %420 = vmatprep.subr.bf16.mxu0 0
        %421 = vmatpush1.bf16.msra.mxu0 0
        %422 = vmatprep.subr.bf16.mxu0 0
        %423 = vmatpush1.bf16.msra.mxu0 0
        %424 = vmatprep.subr.bf16.mxu0 0
        %425 = vmatpush1.bf16.msra.mxu0 0
        %426 = vmatprep.subr.bf16.mxu0 0
        %427 = vmatpush1.bf16.msra.mxu0 0
        %428 = vmatprep.subr.bf16.mxu0 0
        %429 = vmatpush1.bf16.msra.mxu0 0
        %430 = vmatprep.subr.bf16.mxu0 0
        %431 = vmatpush1.bf16.msra.mxu0 0
        %432 = vmatprep.subr.bf16.mxu0 0
        %433 = vmatpush1.bf16.msra.mxu0 0
        %434 = vmatprep.subr.bf16.mxu0 0
        %435 = vmatpush1.bf16.msra.mxu0 0
        %436 = vmatprep.subr.bf16.mxu0 0
        %437 = vmatpush1.bf16.msra.mxu0 0
        %438 = vmatprep.subr.bf16.mxu0 0
        %439 = vmatpush1.bf16.msra.mxu0 0
        %440 = vmatprep.subr.bf16.mxu0 0
        %441 = vmatpush1.bf16.msra.mxu0 0
        %442 = vmatprep.mubr.bf16.mxu0 0
        %443 = vmatmul.mubr.bf16.gmra.mrb[0].mxu0 %v408
        %v444 = vpop.f32.mrb[0].mxu0
        %v445 = vadd.f32 0.0, %v444
        %v446 = vpop.f32.mrb[0].mxu0
        %v447 = vpop.f32.mrb[0].mxu0
        %v448 = vadd.f32 0.0, %v447
        %v449 = vpop.f32.mrb[0].mxu0
        %450 = vdwg.mxu0
        %v451 = vadd.f32 %v381, %v445
        %v452 = vadd.f32 %v382, %v448
        %v453 = vmax.f32 %v451, 0.0
        %v454 = vmax.f32 %v452, 0.0
        %v455 = vpack.c.bf16 %v454, %v453
        %v456 = vld [vmem:[%s4] sm:$0xf]
        %v457 = vld [vmem:[%s4 + $0x4] sm:$0xf]
        %v458 = vld [vmem:[%s4 + $0x8] sm:$0xf]
        %v459 = vld [vmem:[%s4 + $0xc] sm:$0xf]
        %v464 = vunpack.c.l.b16 %v456
        %v465 = vunpack.c.l.b16 %v457
        %v466 = vunpack.c.l.b16 %v458
        %v467 = vunpack.c.l.b16 %v459
        %v468 = vpack.c.b16 %v465, %v464
        %v469 = vpack.c.b16 %v467, %v466
        %v473 = vsel %vm406, %v455, 0
        %475 = vmatprep.subr.bf16.mxu0 0
        %476 = vmatpush1.bf16.msra.mxu0 %v468
        %477 = vmatprep.subr.bf16.mxu0 0
        %478 = vmatpush1.bf16.msra.mxu0 %v469
        %479 = vmatprep.subr.bf16.mxu0 0
        %480 = vmatpush1.bf16.msra.mxu0 0
        %481 = vmatprep.subr.bf16.mxu0 0
        %482 = vmatpush1.bf16.msra.mxu0 0
        %483 = vmatprep.subr.bf16.mxu0 0
        %484 = vmatpush1.bf16.msra.mxu0 0
        %485 = vmatprep.subr.bf16.mxu0 0
        %486 = vmatpush1.bf16.msra.mxu0 0
        %487 = vmatprep.subr.bf16.mxu0 0
        %488 = vmatpush1.bf16.msra.mxu0 0
        %489 = vmatprep.subr.bf16.mxu0 0
        %490 = vmatpush1.bf16.msra.mxu0 0
        %491 = vmatprep.subr.bf16.mxu0 0
        %492 = vmatpush1.bf16.msra.mxu0 0
        %493 = vmatprep.subr.bf16.mxu0 0
        %494 = vmatpush1.bf16.msra.mxu0 0
        %495 = vmatprep.subr.bf16.mxu0 0
        %496 = vmatpush1.bf16.msra.mxu0 0
        %497 = vmatprep.subr.bf16.mxu0 0
        %498 = vmatpush1.bf16.msra.mxu0 0
        %499 = vmatprep.subr.bf16.mxu0 0
        %500 = vmatpush1.bf16.msra.mxu0 0
        %501 = vmatprep.subr.bf16.mxu0 0
        %502 = vmatpush1.bf16.msra.mxu0 0
        %503 = vmatprep.subr.bf16.mxu0 0
        %504 = vmatpush1.bf16.msra.mxu0 0
        %505 = vmatprep.subr.bf16.mxu0 0
        %506 = vmatpush1.bf16.msra.mxu0 0
        %507 = vmatprep.mubr.bf16.mxu0 0
        %508 = vmatmul.mubr.bf16.gmra.mrb[0].mxu0 %v473
        %v509 = vpop.f32.mrb[0].mxu0
        %v510 = vadd.f32 0.0, %v509
        %v511 = vpop.f32.mrb[0].mxu0
        %v512 = vpop.f32.mrb[0].mxu0
        %v513 = vadd.f32 0.0, %v512
        %v514 = vpop.f32.mrb[0].mxu0
        %515 = vdwg.mxu0
        %v516 = vtanh.pop %v510
        %v517 = vtanh.pop %v513
        %vm518 = vcmask 48128
        %v519 = vsel %vm518, %v516, 0.0
        %v520 = vrot.slane %v519, 4
        %v521 = vadd.f32 %v519, %v520
        %v522 = vrot.slane %v521, 2
        %v523 = vadd.f32 %v521, %v522
        %v524 = vrot.slane %v523, 1
        %v525 = vadd.f32 %v523, %v524
        %v526 = vsel %vm518, %v517, 0.0
        %v527 = vrot.slane %v526, 4
        %v528 = vadd.f32 %v526, %v527
        %v529 = vrot.slane %v528, 2
        %v530 = vadd.f32 %v528, %v529
        %v531 = vrot.slane %v530, 1
        %v532 = vadd.f32 %v530, %v531
        %v533 = vmul.f32 %v525, 0.125
        %v534 = vmul.f32 %v532, 0.125
        %v535 = vlaneseq
        %v536 = vand.u32 %v535, 127
        %vm537 = vcmp.eq.s32.totalorder %v536, 0
        %vm538 = vcmp.eq.s32.totalorder %v536, 4
        %vm539 = vmor %vm537, %vm538
        %v540 = vsel %vm539, 1.0, 0.0
        %v541 = vmul.f32 %v533, 0.1
        %v542 = vmul.f32 %v534, 0.1
        %v543 = vadd.f32 %v541, %v540
        %v544 = vadd.f32 %v542, %v540
        %v547 = vrot.slane %v544, 7
        %vm548 = vcmask 1041409
        %v549 = vsel %vm548, %v547, %v543
        %vm551 = vcmask 41984
        %552 = vst.msk [vmem:[%s294] sm:$0x3] %vm551, %v549
        %s553 = sand.u32 %s160, 1
        %s554 = scalar_lea.sflag [#allocation5], %s553
        %s555 = sand.u32 %s160, 1
        %s556 = smul.addr %s555, 2
        %s557 = scalar_lea.vmem [#allocation9], %s556
        // Predicated region
        $region57: #{tpu_custom_call.1} parent=39 // pred_check
          %p558 = pneg %p170
        $region58: #{tpu_custom_call.1} parent=39 // pred_check_branch
          %560 = sbr.rel (%p558) target = $region60
        $region59: #{tpu_custom_call.1} parent=39 // pred_region
          %s562 = ssub.s32 32, 32
          %563 = vsyncadd %s554, %s562
          %s564 = sadd.s32 %s25, %s26
          %s565 = smul.addr %s564, 32
          %s566 = scalar_lea.hbm %s5, %s565
          %s568 = sshll.u32 %s557, 4
          %s569 = int_to_ptr.vmem [resolvable:$true] %s568
          %571 = dma.vmem_to_hbm [thread:$0]  %s569, 32, %s566, %s554
        $region60: #{tpu_custom_call.1} parent=39 // pred_fallthru
          _
      $region40: #{tpu_custom_call.1} parent=5 // pred_fallthru
        _
      %p572 = scmp.le.s32.totalorder 2, %s16
      // Predicated region
      $region61: #{tpu_custom_call.1} parent=5 // pred_check
        %p573 = pneg %p572
      $region62: #{tpu_custom_call.1} parent=5 // pred_check_branch
        %575 = sbr.rel (%p573) target = $region64
      $region63: #{tpu_custom_call.1} parent=5 // pred_region
        %s576 = ssub.s32 %s16, 2
        // Predicated region
        $region65: #{tpu_custom_call.1} parent=63 // pred_check
          %p577 = pneg %p176
        $region66: #{tpu_custom_call.1} parent=63 // pred_check_branch
          %579 = sbr.rel (%p577) target = $region68
        $region67: #{tpu_custom_call.1} parent=63 // pred_region
          %s580 = sand.u32 %s161, 1
          %s581 = scalar_lea.sflag [#allocation5], %s580
          %s582 = sand.u32 %s161, 1
          %s583 = smul.addr %s582, 2
          %s584 = scalar_lea.vmem [#allocation9], %s583
          %585 = dma.done %s581, 32
        $region68: #{tpu_custom_call.1} parent=63 // pred_fallthru
          _
      $region64: #{tpu_custom_call.1} parent=5 // pred_fallthru
        _
    $region6: #{tpu_custom_call.1} parent=1 // loop_footer
      %s20 = sadd.s32 1, %s16
    $region7: #{tpu_custom_call.1} parent=1 // loop_footer_branch
      %15 = sbr.rel target = $region3
    $region8: #{tpu_custom_call.1} parent=1 // loop_exit
      _
    %586 = vsyncpa [#allocation4], 1
    %s587 = scalar_lea.sflag [#allocation4], 1
    %588 = vsyncpa %s587, 1
    %589 = vsyncpa [#allocation7], 1
    %590 = vsyncpa [#allocation5], 1
    %s591 = scalar_lea.sflag [#allocation5], 1
    %592 = vsyncpa %s591, 1

</llo_original>
